<compile_context>
chip_gen: v7x
topology: tpu7x:2x2x1
jax: 0.10.0
libtpu: 0.0.40
codegen_flags: <defaults>
</compile_context>

<pallas_src>
import functools

import jax
import jax.numpy as jnp
from jax.experimental import pallas as pl
from jax.experimental.pallas import tpu as pltpu

_LANE = 128
_ROW_ALIGN = 16  # bf16 sublane packing: 16 rows per packed sublane pair


def _round_up(x, m):
    return (x + m - 1) // m * m


def _device_kind():
    try:
        return jax.devices()[0].device_kind.lower()
    except Exception:  # pragma: no cover - defensive; fall back to conservative
        return ""


# ----------------------------- Pallas kernel ------------------------------ #
def _linear_bias_kernel(x_ref, w_ref, b_ref, o_ref):
    # (tm, K) bf16 @ (K, N) bf16 -> f32 accumulation on the MXU, fused bias add,
    # single rounding to the output dtype at the end.
    acc = jnp.dot(x_ref[...], w_ref[...], preferred_element_type=jnp.float32)
    o_ref[...] = (acc + b_ref[...]).astype(o_ref.dtype)


def pallas_linear(x, w_t, bias, *, out_dtype=jnp.bfloat16, block_m=None):
    """y = x @ w_t + bias.   x:(M,K)  w_t:(K,N)  bias:(N,)  ->  (M,N) out_dtype."""
    M, K = x.shape
    K2, N = w_t.shape
    assert K == K2 and bias.shape == (N,)

    # Generation-gated knobs.
    kind = _device_kind()
    big_vmem = any(s in kind for s in ("v3", "v4", "v5", "v6"))  # 128 MiB parts
    two_cores = ("v7" in kind) or ("7x" in kind)                 # v7x: 2 TCs
    if block_m is None:
        block_m = 1024 if big_vmem else 512
    vmem_budget = (64 << 20) if big_vmem else (20 << 20)
    vmem_limit = (96 << 20) if big_vmem else (32 << 20)

    # Lane-dense output: pad N (embedding dim) up to a multiple of 128.
    # TODO(synk): if E is not a multiple of 128, prefer padding at the model
    # level so downstream consumes the padded layout instead of the column slice.
    n_pad = _round_up(N, _LANE)
    if n_pad != N:
        w_t = jnp.pad(w_t, ((0, 0), (0, n_pad - N)))
        bias = jnp.pad(bias, (0, n_pad - N))

    in_isz = jnp.dtype(x.dtype).itemsize
    w_isz = jnp.dtype(w_t.dtype).itemsize
    out_isz = jnp.dtype(out_dtype).itemsize

    def vmem_bytes(tm):
        return (2 * tm * K * in_isz            # double-buffered input row tile
                + 2 * tm * n_pad * out_isz     # double-buffered output tile
                + 2 * K * n_pad * w_isz        # weight: counted 2x (default dbl-buffer)
                + 2 * 2 * n_pad * 4)           # bias (f32), counted 2x

    # Row tile: multiple of 16 rows, as large as possible under the VMEM budget.
    m16 = _round_up(M, _ROW_ALIGN)
    tm = max(_ROW_ALIGN, min(_round_up(block_m, _ROW_ALIGN), m16))
    while tm > _ROW_ALIGN and vmem_bytes(tm) > vmem_budget:
        tm = _round_up(tm // 2, _ROW_ALIGN)
    # Prefer the largest tile <= tm that divides the 16-rounded row count so no
    # grid step is mostly padding (e.g. M=800 -> tm=400 or 800, not 512).
    for cand in range(tm, _ROW_ALIGN - 1, -_ROW_ALIGN):
        if m16 % cand == 0:
            tm = cand
            break
    # v7x: two TensorCores share the ("parallel",) row axis -- keep grid even.
    if two_cores and (m16 // tm) % 2 == 1 and tm >= 2 * _ROW_ALIGN:
        tm = _round_up(tm // 2, _ROW_ALIGN)

    grid_m = pl.cdiv(m16, tm)
    m_pad = grid_m * tm
    if m_pad != M:
        x = jnp.pad(x, ((0, m_pad - M), (0, 0)))

    out = pl.pallas_call(
        _linear_bias_kernel,
        out_shape=jax.ShapeDtypeStruct((m_pad, n_pad), out_dtype),
        grid=(grid_m,),
        in_specs=[
            pl.BlockSpec((tm, K), lambda i: (i, 0)),        # streamed row tiles
            pl.BlockSpec((K, n_pad), lambda i: (0, 0)),     # resident weight
            pl.BlockSpec((1, n_pad), lambda i: (0, 0)),     # resident bias
        ],
        out_specs=pl.BlockSpec((tm, n_pad), lambda i: (i, 0)),
        compiler_params=pltpu.CompilerParams(
            dimension_semantics=("parallel",),
            vmem_limit_bytes=vmem_limit,
        ),
    )(x, w_t, bias.reshape(1, n_pad).astype(jnp.float32))

    if m_pad != M:
        out = out[:M]
    if n_pad != N:
        out = out[:, :N]
    return out


# ------------------------------ module glue -------------------------------- #
def cuboids_forward(x_ncthw, weight, bias, tubelet, *, out_dtype=jnp.bfloat16):
    """Cuboids.forward.  x:(B,C,T,H,W), weight:(E, pt*ph*pw*C), bias:(E,)."""
    pt, ph, pw = tubelet
    B, C, T, H, W = x_ncthw.shape
    assert T % pt == 0 and H % ph == 0 and W % pw == 0
    To, Ho, Wo = T // pt, H // ph, W // pw
    E, K = weight.shape
    assert K == pt * ph * pw * C

    # einops 'b c (t pt) (h ph) (w pw) -> b (t h w) (pt ph pw c)', but the patch
    # feature axis is materialized in '(c pt ph pw)' order: pw stays innermost so
    # the transpose copies contiguous pw-runs; the weight is permuted to match.
    xb = x_ncthw.astype(jnp.bfloat16)            # cast before transpose (fuses)
    patches = (xb.reshape(B, C, To, pt, Ho, ph, Wo, pw)
                 .transpose(0, 2, 4, 6, 1, 3, 5, 7)      # (B,To,Ho,Wo,C,pt,ph,pw)
                 .reshape(B * To * Ho * Wo, K))

    # weight is (E, (pt ph pw c)); re-order K to (c pt ph pw), then transpose.
    w_perm = (weight.reshape(E, pt, ph, pw, C)
                    .transpose(0, 4, 1, 2, 3)            # (E, C, pt, ph, pw)
                    .reshape(E, K))
    w_t = w_perm.T.astype(jnp.bfloat16)                  # (K, E)

    emb = pallas_linear(patches, w_t, bias.astype(jnp.float32),
                        out_dtype=out_dtype)
    return emb.reshape(B, To * Ho * Wo, E)


# --------------------------- pure-JAX reference ---------------------------- #
def ref_cuboids(x_ncthw, weight, bias, tubelet):
    pt, ph, pw = tubelet
    B, C, T, H, W = x_ncthw.shape
    To, Ho, Wo = T // pt, H // ph, W // pw
    E = weight.shape[0]
    xr = x_ncthw.astype(jnp.float32).reshape(B, C, To, pt, Ho, ph, Wo, pw)
    wr = weight.reshape(E, pt, ph, pw, C)
    # contract over (pt, ph, pw, C); token order = (To, Ho, Wo)
    y = jnp.einsum('bcaimjnk,eijkc->bamne', xr, wr) + bias
    return y.reshape(B, To * Ho * Wo, E)


if __name__ == "__main__":
    key = jax.random.PRNGKey(0)
    # Small shapes consistent with the module:
    #   x: (B, C, T, H, W) = (2, 4, 8, 40, 40), tubelet (pt, ph, pw) = (2, 4, 4)
    #   -> 4*10*10 = 400 cuboids/sample, cuboid dim K = 2*4*4*4 = 128, embed 128.
    # M = 800 rows -> tm = 800 (single tile, 128-MiB parts) or 400 (even grid).
    B, C, T, H, W = 2, 4, 8, 40, 40
    tubelet = (2, 4, 4)
    embed_dim = 128
    K = tubelet[0] * tubelet[1] * tubelet[2] * C

    kx, kw, kb = jax.random.split(key, 3)
    x = jax.random.normal(kx, (B, C, T, H, W), jnp.float32)
    weight = jax.random.normal(kw, (embed_dim, K), jnp.float32) / jnp.sqrt(float(K))
    bias = 0.1 * jax.random.normal(kb, (embed_dim,), jnp.float32)

    fwd = jax.jit(functools.partial(cuboids_forward, tubelet=tubelet))
    out = jax.block_until_ready(fwd(x, weight, bias))

    ref = ref_cuboids(x, weight, bias, tubelet)
    n_tokens = (T // tubelet[0]) * (H // tubelet[1]) * (W // tubelet[2])
    assert out.shape == (B, n_tokens, embed_dim), out.shape
    assert out.dtype == jnp.bfloat16, out.dtype
    # bf16 operands + bf16 output (intentional, per perf review); f32 MXU accum.
    err = float(jnp.max(jnp.abs(out.astype(jnp.float32) - ref) / (1.0 + jnp.abs(ref))))
    assert err < 4e-2, err
    print("KERNEL_OK")
</pallas_src>

<mosaic_0001>
module attributes {stable_mosaic.version = 11 : i64} {
  func.func @_linear_bias_kernel(%arg0: i32, %arg1: memref<400x128xbf16, #tpu.memory_space<vmem>>, %arg2: memref<128x128xbf16, #tpu.memory_space<vmem>>, %arg3: memref<1x128xf32, #tpu.memory_space<vmem>>, %arg4: memref<400x128xbf16, #tpu.memory_space<vmem>>) attributes {dimension_semantics = [#tpu.dimension_semantics<parallel>], iteration_bounds = array<i64: 2>, scalar_prefetch = 0 : i64, scratch_operands = 0 : i64, tpu.core_type = #tpu.core_type<tc>, window_params = [{transform_indices = @transform_0, window_bounds = array<i64: 400, 128>}, {pipeline_mode = #tpu.pipeline_mode<synchronous>, transform_indices = @transform_1, window_bounds = array<i64: 128, 128>}, {pipeline_mode = #tpu.pipeline_mode<synchronous>, transform_indices = @transform_2, window_bounds = array<i64: 1, 128>}, {transform_indices = @transform_3, window_bounds = array<i64: 400, 128>}]} {
    %c0 = arith.constant 0 : index
    %c0_0 = arith.constant 0 : index
    %0 = vector.load %arg1[%c0, %c0_0] : memref<400x128xbf16, #tpu.memory_space<vmem>>, vector<400x128xbf16>
    %c0_1 = arith.constant 0 : index
    %c0_2 = arith.constant 0 : index
    %1 = vector.load %arg2[%c0_1, %c0_2] : memref<128x128xbf16, #tpu.memory_space<vmem>>, vector<128x128xbf16>
    %cst = arith.constant dense<0.000000e+00> : vector<400x128xf32>
    %2 = tpu.matmul %0, %1, %cst {dimension_numbers = #tpu.dot_dimension_numbers<[1], [0], [0], [1], [0, 0, 1, 1], [], []>} : vector<400x128xbf16>, vector<128x128xbf16>, vector<400x128xf32> -> vector<400x128xf32>
    %c0_3 = arith.constant 0 : index
    %c0_4 = arith.constant 0 : index
    %3 = vector.load %arg3[%c0_3, %c0_4] : memref<1x128xf32, #tpu.memory_space<vmem>>, vector<1x128xf32>
    %4 = vector.broadcast %3 : vector<1x128xf32> to vector<400x128xf32>
    %5 = arith.addf %2, %4 : vector<400x128xf32>
    %6 = arith.truncf %5 : vector<400x128xf32> to vector<400x128xbf16>
    %c0_5 = arith.constant 0 : index
    %c0_6 = arith.constant 0 : index
    %7 = vector.load %arg4[%c0_5, %c0_6] : memref<400x128xbf16, #tpu.memory_space<vmem>>, vector<400x128xbf16>
    tpu.vector_store %arg4[%c0_5, %c0_6], %6 {strides = array<i32>} : memref<400x128xbf16, #tpu.memory_space<vmem>>, vector<400x128xbf16>,
    return
  }
  func.func @transform_0(%arg0: i32) -> (i32, i32) {
    %c0_i32 = arith.constant 0 : i32
    %c0_i32_0 = arith.constant 0 : i32
    return %arg0, %c0_i32 : i32, i32
  }
  func.func @transform_1(%arg0: i32) -> (i32, i32) {
    %c0_i32 = arith.constant 0 : i32
    %c0_i32_0 = arith.constant 0 : i32
    %c0_i32_1 = arith.constant 0 : i32
    return %c0_i32, %c0_i32_0 : i32, i32
  }
  func.func @transform_2(%arg0: i32) -> (i32, i32) {
    %c0_i32 = arith.constant 0 : i32
    %c0_i32_0 = arith.constant 0 : i32
    %c0_i32_1 = arith.constant 0 : i32
    return %c0_i32, %c0_i32_0 : i32, i32
  }
  func.func @transform_3(%arg0: i32) -> (i32, i32) {
    %c0_i32 = arith.constant 0 : i32
    %c0_i32_0 = arith.constant 0 : i32
    return %arg0, %c0_i32 : i32, i32
  }
}

</mosaic_0001>

<llo_original>
// kernel: cuboids_forward.1
$region0: #{cuboids_forward.1}
  #allocation0 [shape = 'u32[]', space=smem, size = 0x4, offset = 0x4, fixed_abs, tag = 'smem constant byte address 0x4 - core index']
  #allocation1 [shape = 'u32[144,128]{1,0:T(1,128)}', space=vmem, size = 0x12000, scoped, tag = 'internal scratch']
  %s0 = inlined_call_operand.vmem [shape: bf16[800,128], index: 0, kind: input, shape index: {}]
  %s1 = inlined_call_operand.vmem [shape: bf16[128,128], index: 1, kind: input, shape index: {}]
  %s2 = inlined_call_operand.vmem [shape: f32[1,128], index: 2, kind: input, shape index: {}]
  %s3 = inlined_call_operand.hbm [shape: bf16[800,128], index: 3, kind: output, shape index: {}]
  %s4 = sld [smem:[#allocation0]]
  $region45: #{cuboids_forward.1} parent=0
    _
  %s6 = ssub.s32 1, %s4
  %s7 = scalar_select 0, %s6, %s4
  $region1: #{cuboids_forward.1} parent=0
    #allocation2 [shape = 'u8[204800]{0}', space=vmem, size = 0x32000, scoped, tag = 'output window, operand 0']
    #allocation3 [shape = 's32[2]{0}', space=sflag, size = 0x8, scoped, tag = 'scoped memory for cuboids_forward.1']
    %8 = vsyncpa [#allocation3], 0
    %s9 = scalar_lea.sflag [#allocation3], 1
    %10 = vsyncpa %s9, 0
    loop: start=0, step=1, limit=4
    $region2: #{cuboids_forward.1} parent=1 // loop_pre_header
      _
    $region3: #{cuboids_forward.1} parent=1 // loop_header
      %s12 = sphi 0, %s16
      %p13 = scmp.ge.s32.totalorder %s12, 4
      %s22 = sphi 0, %s24
      %s25 = sphi 0, %s22
      %s26 = sphi 0, %s25
      %s42 = sphi 0, %s26
      %s46 = sphi 0, %s46
      %s48 = sphi 0, %s46
      %s49 = sphi 0, %s48
      %s63 = sphi 0, %s49
      %s67 = sphi 0, %s67
      %s69 = sphi 0, %s67
      %s70 = sphi 0, %s69
      %s84 = sphi 0, %s70
      %s90 = sphi 0, %s92
      %s93 = sphi 0, %s90
      %s94 = sphi 0, %s93
      %s110 = sphi 0, %s94
    $region4: #{cuboids_forward.1} parent=1 // loop_header_branch
      %15 = sbr.rel (%p13) target = $region8
    $region5: #{cuboids_forward.1} parent=1 // loop_body
      %s17 = ssub.s32 %s12, 1
      %s18 = ssub.s32 %s12, 2
      %s19 = sadd.s32 %s12, 1
      %s20 = ssub.s32 %s12, %s19
      %p21 = scmp.eq.s32.totalorder %s20, 0
      %s23 = sadd.s32 %s22, 1
      %s24 = scalar_select %p21, %s22, %s23
      %p27 = pneg %p21
      %p28 = scmp.eq.s32.totalorder %s12, 1
      %p29 = por %p27, %p28
      %p30 = scmp.ne.s32.totalorder %s22, %s25
      %p31 = scmp.eq.s32.totalorder %s12, 0
      %p32 = por %p30, %p31
      %p33 = scmp.ne.s32.totalorder %s22, %s25
      %p34 = scmp.eq.s32.totalorder %s17, 1
      %p35 = por %p33, %p34
      %p36 = scmp.ne.s32.totalorder %s25, %s26
      %p37 = scmp.eq.s32.totalorder %s17, 0
      %p38 = por %p36, %p37
      %p39 = scmp.ne.s32.totalorder %s25, %s26
      %p40 = scmp.eq.s32.totalorder %s18, 1
      %p41 = por %p39, %p40
      %p43 = scmp.ne.s32.totalorder %s26, %s42
      %p44 = scmp.eq.s32.totalorder %s18, 0
      %p45 = por %p43, %p44
      %s47 = sadd.s32 %s46, 1
      %p50 = scmp.eq.s32.totalorder %s12, 1
      %p51 = scmp.ne.s32.totalorder %s46, %s48
      %p52 = scmp.eq.s32.totalorder %s12, 0
      %p53 = por %p51, %p52
      %p54 = scmp.ne.s32.totalorder %s46, %s48
      %p55 = scmp.eq.s32.totalorder %s17, 1
      %p56 = por %p54, %p55
      %p57 = scmp.ne.s32.totalorder %s48, %s49
      %p58 = scmp.eq.s32.totalorder %s17, 0
      %p59 = por %p57, %p58
      %p60 = scmp.ne.s32.totalorder %s48, %s49
      %p61 = scmp.eq.s32.totalorder %s18, 1
      %p62 = por %p60, %p61
      %p64 = scmp.ne.s32.totalorder %s49, %s63
      %p65 = scmp.eq.s32.totalorder %s18, 0
      %p66 = por %p64, %p65
      %s68 = sadd.s32 %s67, 1
      %p71 = scmp.eq.s32.totalorder %s12, 1
      %p72 = scmp.ne.s32.totalorder %s67, %s69
      %p73 = scmp.eq.s32.totalorder %s12, 0
      %p74 = por %p72, %p73
      %p75 = scmp.ne.s32.totalorder %s67, %s69
      %p76 = scmp.eq.s32.totalorder %s17, 1
      %p77 = por %p75, %p76
      %p78 = scmp.ne.s32.totalorder %s69, %s70
      %p79 = scmp.eq.s32.totalorder %s17, 0
      %p80 = por %p78, %p79
      %p81 = scmp.ne.s32.totalorder %s69, %s70
      %p82 = scmp.eq.s32.totalorder %s18, 1
      %p83 = por %p81, %p82
      %p85 = scmp.ne.s32.totalorder %s70, %s84
      %p86 = scmp.eq.s32.totalorder %s18, 0
      %p87 = por %p85, %p86
      %s88 = ssub.s32 %s12, %s19
      %p89 = scmp.eq.s32.totalorder %s88, 0
      %s91 = sadd.s32 %s90, 1
      %s92 = scalar_select %p89, %s90, %s91
      %p95 = pneg %p89
      %p96 = scmp.eq.s32.totalorder %s12, 1
      %p97 = por %p95, %p96
      %p98 = scmp.ne.s32.totalorder %s90, %s93
      %p99 = scmp.eq.s32.totalorder %s12, 0
      %p100 = por %p98, %p99
      %p101 = scmp.ne.s32.totalorder %s90, %s93
      %p102 = scmp.eq.s32.totalorder %s17, 1
      %p103 = por %p101, %p102
      %p104 = scmp.ne.s32.totalorder %s93, %s94
      %p105 = scmp.eq.s32.totalorder %s17, 0
      %p106 = por %p104, %p105
      %p107 = scmp.ne.s32.totalorder %s93, %s94
      %p108 = scmp.eq.s32.totalorder %s18, 1
      %p109 = por %p107, %p108
      %p111 = scmp.ne.s32.totalorder %s94, %s110
      %p112 = scmp.eq.s32.totalorder %s18, 0
      %p113 = por %p111, %p112
      %p114 = scmp.le.s32.totalorder 1, %s12
      %p115 = scmp.lt.s32.totalorder %s12, 3
      %p116 = pnand %p114, %p115
      %p117 = pneg %p116
      // Predicated region
      $region9: #{cuboids_forward.1} parent=5 // pred_check
        _
      $region10: #{cuboids_forward.1} parent=5 // pred_check_branch
        %119 = sbr.rel (%p116) target = $region12
      $region11: #{cuboids_forward.1} parent=5 // pred_region
        %s120 = ssub.s32 %s12, 1
        // Predicated region
        $region13: #{cuboids_forward.1} parent=11 // pred_check
          %p121 = pneg %p59
        $region14: #{cuboids_forward.1} parent=11 // pred_check_branch
          %123 = sbr.rel (%p121) target = $region16
        $region15: #{cuboids_forward.1} parent=11 // pred_region
          _
        $region16: #{cuboids_forward.1} parent=11 // pred_fallthru
          _
        // Predicated region
        $region17: #{cuboids_forward.1} parent=11 // pred_check
          %p124 = pneg %p80
        $region18: #{cuboids_forward.1} parent=11 // pred_check_branch
          %126 = sbr.rel (%p124) target = $region20
        $region19: #{cuboids_forward.1} parent=11 // pred_region
          _
        $region20: #{cuboids_forward.1} parent=11 // pred_fallthru
          _
      $region12: #{cuboids_forward.1} parent=5 // pred_fallthru
        _
      %p127 = scmp.lt.s32.totalorder %s12, 2
      // Predicated region
      $region21: #{cuboids_forward.1} parent=5 // pred_check
        %p128 = pneg %p127
      $region22: #{cuboids_forward.1} parent=5 // pred_check_branch
        %130 = sbr.rel (%p128) target = $region24
      $region23: #{cuboids_forward.1} parent=5 // pred_region
        // Predicated region
        $region25: #{cuboids_forward.1} parent=23 // pred_check
          %p131 = pneg %p32
        $region26: #{cuboids_forward.1} parent=23 // pred_check_branch
          %133 = sbr.rel (%p131) target = $region28
        $region27: #{cuboids_forward.1} parent=23 // pred_region
          %s134 = smul.u32 50, %s12
          %p135 = scmp.lt.s32.totalorder %s134, 99
          %s136 = scalar_select %p135, %s134, 99
          %s137 = smul.addr %s136, 4
          %s138 = scalar_lea.vmem %s0, %s137
          %s139 = smul.u32 50, %s12
        $region28: #{cuboids_forward.1} parent=23 // pred_fallthru
          _
      $region24: #{cuboids_forward.1} parent=5 // pred_fallthru
        _
      %p140 = scmp.le.s32.totalorder 1, %s12
      %p141 = scmp.lt.s32.totalorder %s12, 3
      %p142 = pnand %p140, %p141
      %p143 = pneg %p142
      // Predicated region
      $region29: #{cuboids_forward.1} parent=5 // pred_check
        _
      $region30: #{cuboids_forward.1} parent=5 // pred_check_branch
        %145 = sbr.rel (%p142) target = $region32
      $region31: #{cuboids_forward.1} parent=5 // pred_region
        %s146 = ssub.s32 %s12, 1
        %s147 = smul.u32 50, %s17
        %p148 = scmp.lt.s32.totalorder %s147, 99
        %s149 = scalar_select %p148, %s147, 99
        %s150 = smul.addr %s149, 4
        %s151 = scalar_lea.vmem %s0, %s150
        %p152 = pneg %p38
        %p153 = pneg %p35
        %p154 = pneg %p59
        %p155 = pneg %p56
        %p156 = pneg %p80
        %p157 = pneg %p77
        %p158 = pneg %p106
        %p159 = pneg %p103
        %s160 = sand.u32 %s93, 1
        %s161 = scalar_lea.sflag [#allocation3], %s160
        %s162 = sand.u32 %s93, 1
        %s163 = smul.addr %s162, 200
        %s164 = scalar_lea.vmem [#allocation2], %s163
        %s165 = smul.u32 50, %s17
        %p166 = scmp.lt.s32.totalorder %s165, 99
        %s167 = scalar_select %p166, %s165, 99
        %s168 = smul.addr %s167, 4
        %s169 = scalar_lea.vmem %s0, %s168
        %s170 = smul.u32 50, %s17
        %s171 = smul.u32 50, %s17
        %v173 = vld [vmem:[%s169] sm:$0xf]
        %v174 = vld [vmem:[%s169 + $0x4] sm:$0xf]
        %v175 = vld [vmem:[%s169 + $0x8] sm:$0xf]
        %v176 = vld [vmem:[%s169 + $0xc] sm:$0xf]
        %v177 = vld [vmem:[%s169 + $0x10] sm:$0xf]
        %v178 = vld [vmem:[%s169 + $0x14] sm:$0xf]
        %v179 = vld [vmem:[%s169 + $0x18] sm:$0xf]
        %v180 = vld [vmem:[%s169 + $0x1c] sm:$0xf]
        %v181 = vld [vmem:[%s169 + $0x20] sm:$0xf]
        %v182 = vld [vmem:[%s169 + $0x24] sm:$0xf]
        %v183 = vld [vmem:[%s169 + $0x28] sm:$0xf]
        %v184 = vld [vmem:[%s169 + $0x2c] sm:$0xf]
        %v185 = vld [vmem:[%s169 + $0x30] sm:$0xf]
        %v186 = vld [vmem:[%s169 + $0x34] sm:$0xf]
        %v187 = vld [vmem:[%s169 + $0x38] sm:$0xf]
        %v188 = vld [vmem:[%s169 + $0x3c] sm:$0xf]
        %v189 = vld [vmem:[%s169 + $0x40] sm:$0xf]
        %v190 = vld [vmem:[%s169 + $0x44] sm:$0xf]
        %v191 = vld [vmem:[%s169 + $0x48] sm:$0xf]
        %v192 = vld [vmem:[%s169 + $0x4c] sm:$0xf]
        %v193 = vld [vmem:[%s169 + $0x50] sm:$0xf]
        %v194 = vld [vmem:[%s169 + $0x54] sm:$0xf]
        %v195 = vld [vmem:[%s169 + $0x58] sm:$0xf]
        %v196 = vld [vmem:[%s169 + $0x5c] sm:$0xf]
        %v197 = vld [vmem:[%s169 + $0x60] sm:$0xf]
        %v198 = vld [vmem:[%s169 + $0x64] sm:$0xf]
        %v199 = vld [vmem:[%s169 + $0x68] sm:$0xf]
        %v200 = vld [vmem:[%s169 + $0x6c] sm:$0xf]
        %v201 = vld [vmem:[%s169 + $0x70] sm:$0xf]
        %v202 = vld [vmem:[%s169 + $0x74] sm:$0xf]
        %v203 = vld [vmem:[%s169 + $0x78] sm:$0xf]
        %v204 = vld [vmem:[%s169 + $0x7c] sm:$0xf]
        %v205 = vld [vmem:[%s169 + $0x80] sm:$0xf]
        %v206 = vld [vmem:[%s169 + $0x84] sm:$0xf]
        %v207 = vld [vmem:[%s169 + $0x88] sm:$0xf]
        %v208 = vld [vmem:[%s169 + $0x8c] sm:$0xf]
        %v209 = vld [vmem:[%s169 + $0x90] sm:$0xf]
        %v210 = vld [vmem:[%s169 + $0x94] sm:$0xf]
        %v211 = vld [vmem:[%s169 + $0x98] sm:$0xf]
        %v212 = vld [vmem:[%s169 + $0x9c] sm:$0xf]
        %v213 = vld [vmem:[%s169 + $0xa0] sm:$0xf]
        %v214 = vld [vmem:[%s169 + $0xa4] sm:$0xf]
        %v215 = vld [vmem:[%s169 + $0xa8] sm:$0xf]
        %v216 = vld [vmem:[%s169 + $0xac] sm:$0xf]
        %v217 = vld [vmem:[%s169 + $0xb0] sm:$0xf]
        %v218 = vld [vmem:[%s169 + $0xb4] sm:$0xf]
        %v219 = vld [vmem:[%s169 + $0xb8] sm:$0xf]
        %v220 = vld [vmem:[%s169 + $0xbc] sm:$0xf]
        %v221 = vld [vmem:[%s169 + $0xc0] sm:$0xf]
        %v222 = vld [vmem:[%s169 + $0xc4] sm:$0xf]
        %v223 = vld [vmem:[%s1] sm:$0xf]
        %v224 = vld [vmem:[%s1 + $0x4] sm:$0xf]
        %v225 = vld [vmem:[%s1 + $0x8] sm:$0xf]
        %v226 = vld [vmem:[%s1 + $0xc] sm:$0xf]
        %v227 = vld [vmem:[%s1 + $0x10] sm:$0xf]
        %v228 = vld [vmem:[%s1 + $0x14] sm:$0xf]
        %v229 = vld [vmem:[%s1 + $0x18] sm:$0xf]
        %v230 = vld [vmem:[%s1 + $0x1c] sm:$0xf]
        %v231 = vld [vmem:[%s1 + $0x20] sm:$0xf]
        %v232 = vld [vmem:[%s1 + $0x24] sm:$0xf]
        %v233 = vld [vmem:[%s1 + $0x28] sm:$0xf]
        %v234 = vld [vmem:[%s1 + $0x2c] sm:$0xf]
        %v235 = vld [vmem:[%s1 + $0x30] sm:$0xf]
        %v236 = vld [vmem:[%s1 + $0x34] sm:$0xf]
        %v237 = vld [vmem:[%s1 + $0x38] sm:$0xf]
        %v238 = vld [vmem:[%s1 + $0x3c] sm:$0xf]
        %v239 = vld [vmem:[%s2] sm:$0x1]
        %v241 = vlaneseq
        %v242 = vshrl.u32 %v241, 7
        %v243 = vsub.s32 0, %v242
        %v244 = vrot.slane %v239, %v243
        %v296 = vunpack.c.l.b16 %v173
        %v297 = vunpack.c.l.b16 %v174
        %v298 = vunpack.c.l.b16 %v175
        %v299 = vunpack.c.l.b16 %v176
        %v300 = vunpack.c.l.b16 %v177
        %v301 = vunpack.c.l.b16 %v178
        %v302 = vunpack.c.l.b16 %v179
        %v303 = vunpack.c.l.b16 %v180
        %v304 = vunpack.c.l.b16 %v181
        %v305 = vunpack.c.l.b16 %v182
        %v306 = vunpack.c.l.b16 %v183
        %v307 = vunpack.c.l.b16 %v184
        %v308 = vunpack.c.l.b16 %v185
        %v309 = vunpack.c.l.b16 %v186
        %v310 = vunpack.c.l.b16 %v187
        %v311 = vunpack.c.l.b16 %v188
        %v312 = vunpack.c.l.b16 %v189
        %v313 = vunpack.c.l.b16 %v190
        %v314 = vunpack.c.l.b16 %v191
        %v315 = vunpack.c.l.b16 %v192
        %v316 = vunpack.c.l.b16 %v193
        %v317 = vunpack.c.l.b16 %v194
        %v318 = vunpack.c.l.b16 %v195
        %v319 = vunpack.c.l.b16 %v196
        %v320 = vunpack.c.l.b16 %v197
        %v321 = vunpack.c.l.b16 %v198
        %v322 = vunpack.c.l.b16 %v199
        %v323 = vunpack.c.l.b16 %v200
        %v324 = vunpack.c.l.b16 %v201
        %v325 = vunpack.c.l.b16 %v202
        %v326 = vunpack.c.l.b16 %v203
        %v327 = vunpack.c.l.b16 %v204
        %v328 = vunpack.c.l.b16 %v205
        %v329 = vunpack.c.l.b16 %v206
        %v330 = vunpack.c.l.b16 %v207
        %v331 = vunpack.c.l.b16 %v208
        %v332 = vunpack.c.l.b16 %v209
        %v333 = vunpack.c.l.b16 %v210
        %v334 = vunpack.c.l.b16 %v211
        %v335 = vunpack.c.l.b16 %v212
        %v336 = vunpack.c.l.b16 %v213
        %v337 = vunpack.c.l.b16 %v214
        %v338 = vunpack.c.l.b16 %v215
        %v339 = vunpack.c.l.b16 %v216
        %v340 = vunpack.c.l.b16 %v217
        %v341 = vunpack.c.l.b16 %v218
        %v342 = vunpack.c.l.b16 %v219
        %v343 = vunpack.c.l.b16 %v220
        %v344 = vunpack.c.l.b16 %v221
        %v345 = vunpack.c.l.b16 %v222
        %v346 = vpack.c.b16 %v297, %v296
        %v347 = vpack.c.b16 %v299, %v298
        %v348 = vpack.c.b16 %v301, %v300
        %v349 = vpack.c.b16 %v303, %v302
        %v350 = vpack.c.b16 %v305, %v304
        %v351 = vpack.c.b16 %v307, %v306
        %v352 = vpack.c.b16 %v309, %v308
        %v353 = vpack.c.b16 %v311, %v310
        %v354 = vpack.c.b16 %v313, %v312
        %v355 = vpack.c.b16 %v315, %v314
        %v356 = vpack.c.b16 %v317, %v316
        %v357 = vpack.c.b16 %v319, %v318
        %v358 = vpack.c.b16 %v321, %v320
        %v359 = vpack.c.b16 %v323, %v322
        %v360 = vpack.c.b16 %v325, %v324
        %v361 = vpack.c.b16 %v327, %v326
        %v362 = vpack.c.b16 %v329, %v328
        %v363 = vpack.c.b16 %v331, %v330
        %v364 = vpack.c.b16 %v333, %v332
        %v365 = vpack.c.b16 %v335, %v334
        %v366 = vpack.c.b16 %v337, %v336
        %v367 = vpack.c.b16 %v339, %v338
        %v368 = vpack.c.b16 %v341, %v340
        %v369 = vpack.c.b16 %v343, %v342
        %v370 = vpack.c.b16 %v345, %v344
        %v412 = vunpack.c.l.b16 %v223
        %v413 = vunpack.c.l.b16 %v224
        %v414 = vunpack.c.l.b16 %v225
        %v415 = vunpack.c.l.b16 %v226
        %v416 = vunpack.c.l.b16 %v227
        %v417 = vunpack.c.l.b16 %v228
        %v418 = vunpack.c.l.b16 %v229
        %v419 = vunpack.c.l.b16 %v230
        %v420 = vunpack.c.l.b16 %v231
        %v421 = vunpack.c.l.b16 %v232
        %v422 = vunpack.c.l.b16 %v233
        %v423 = vunpack.c.l.b16 %v234
        %v424 = vunpack.c.l.b16 %v235
        %v425 = vunpack.c.l.b16 %v236
        %v426 = vunpack.c.l.b16 %v237
        %v427 = vunpack.c.l.b16 %v238
        %v428 = vpack.c.b16 %v413, %v412
        %v429 = vpack.c.b16 %v415, %v414
        %v430 = vpack.c.b16 %v417, %v416
        %v431 = vpack.c.b16 %v419, %v418
        %v432 = vpack.c.b16 %v421, %v420
        %v433 = vpack.c.b16 %v423, %v422
        %v434 = vpack.c.b16 %v425, %v424
        %v435 = vpack.c.b16 %v427, %v426
        %444 = vmatprep.subr.bf16.mxu0 0
        %445 = vmatpush1.bf16.msra.mxu0 %v428
        %446 = vmatprep.subr.bf16.mxu0 0
        %447 = vmatpush1.bf16.msra.mxu0 %v429
        %448 = vmatprep.subr.bf16.mxu0 0
        %449 = vmatpush1.bf16.msra.mxu0 %v430
        %450 = vmatprep.subr.bf16.mxu0 0
        %451 = vmatpush1.bf16.msra.mxu0 %v431
        %452 = vmatprep.subr.bf16.mxu0 0
        %453 = vmatpush1.bf16.msra.mxu0 %v432
        %454 = vmatprep.subr.bf16.mxu0 0
        %455 = vmatpush1.bf16.msra.mxu0 %v433
        %456 = vmatprep.subr.bf16.mxu0 0
        %457 = vmatpush1.bf16.msra.mxu0 %v434
        %458 = vmatprep.subr.bf16.mxu0 0
        %459 = vmatpush1.bf16.msra.mxu0 %v435
        %460 = vmatprep.subr.bf16.mxu0 0
        %461 = vmatpush1.bf16.msra.mxu0 0
        %462 = vmatprep.subr.bf16.mxu0 0
        %463 = vmatpush1.bf16.msra.mxu0 0
        %464 = vmatprep.subr.bf16.mxu0 0
        %465 = vmatpush1.bf16.msra.mxu0 0
        %466 = vmatprep.subr.bf16.mxu0 0
        %467 = vmatpush1.bf16.msra.mxu0 0
        %468 = vmatprep.subr.bf16.mxu0 0
        %469 = vmatpush1.bf16.msra.mxu0 0
        %470 = vmatprep.subr.bf16.mxu0 0
        %471 = vmatpush1.bf16.msra.mxu0 0
        %472 = vmatprep.subr.bf16.mxu0 0
        %473 = vmatpush1.bf16.msra.mxu0 0
        %474 = vmatprep.subr.bf16.mxu0 0
        %475 = vmatpush1.bf16.msra.mxu0 0
        %476 = vmatprep.mubr.bf16.mxu0 0
        %477 = vmatmul.mubr.bf16.gmra.mrb[0].mxu0 %v346
        %v478 = vpop.f32.mrb[0].mxu0
        %v479 = vadd.f32 %v244, %v478
        %v480 = vpop.f32.mrb[0].mxu0
        %v481 = vpop.f32.mrb[0].mxu0
        %v482 = vadd.f32 %v244, %v481
        %v483 = vpop.f32.mrb[0].mxu0
        %484 = vmatprep.mubr.bf16.mxu0 0
        %485 = vmatmul.mubr.bf16.gmra.mrb[0].mxu0 %v347
        %v486 = vpop.f32.mrb[0].mxu0
        %v487 = vadd.f32 %v244, %v486
        %v488 = vpop.f32.mrb[0].mxu0
        %v489 = vpop.f32.mrb[0].mxu0
        %v490 = vadd.f32 %v244, %v489
        %v491 = vpop.f32.mrb[0].mxu0
        %492 = vmatprep.mubr.bf16.mxu0 0
        %493 = vmatmul.mubr.bf16.gmra.mrb[0].mxu0 %v348
        %v494 = vpop.f32.mrb[0].mxu0
        %v495 = vadd.f32 %v244, %v494
        %v496 = vpop.f32.mrb[0].mxu0
        %v497 = vpop.f32.mrb[0].mxu0
        %v498 = vadd.f32 %v244, %v497
        %v499 = vpop.f32.mrb[0].mxu0
        %500 = vmatprep.mubr.bf16.mxu0 0
        %501 = vmatmul.mubr.bf16.gmra.mrb[0].mxu0 %v349
        %v502 = vpop.f32.mrb[0].mxu0
        %v503 = vadd.f32 %v244, %v502
        %v504 = vpop.f32.mrb[0].mxu0
        %v505 = vpop.f32.mrb[0].mxu0
        %v506 = vadd.f32 %v244, %v505
        %v507 = vpop.f32.mrb[0].mxu0
        %508 = vmatprep.mubr.bf16.mxu0 0
        %509 = vmatmul.mubr.bf16.gmra.mrb[0].mxu0 %v350
        %v510 = vpop.f32.mrb[0].mxu0
        %v511 = vadd.f32 %v244, %v510
        %v512 = vpop.f32.mrb[0].mxu0
        %v513 = vpop.f32.mrb[0].mxu0
        %v514 = vadd.f32 %v244, %v513
        %v515 = vpop.f32.mrb[0].mxu0
        %516 = vmatprep.mubr.bf16.mxu0 0
        %517 = vmatmul.mubr.bf16.gmra.mrb[0].mxu0 %v351
        %v518 = vpop.f32.mrb[0].mxu0
        %v519 = vadd.f32 %v244, %v518
        %v520 = vpop.f32.mrb[0].mxu0
        %v521 = vpop.f32.mrb[0].mxu0
        %v522 = vadd.f32 %v244, %v521
        %v523 = vpop.f32.mrb[0].mxu0
        %524 = vmatprep.mubr.bf16.mxu0 0
        %525 = vmatmul.mubr.bf16.gmra.mrb[0].mxu0 %v352
        %v526 = vpop.f32.mrb[0].mxu0
        %v527 = vadd.f32 %v244, %v526
        %v528 = vpop.f32.mrb[0].mxu0
        %v529 = vpop.f32.mrb[0].mxu0
        %v530 = vadd.f32 %v244, %v529
        %v531 = vpop.f32.mrb[0].mxu0
        %532 = vmatprep.mubr.bf16.mxu0 0
        %533 = vmatmul.mubr.bf16.gmra.mrb[0].mxu0 %v353
        %v534 = vpop.f32.mrb[0].mxu0
        %v535 = vadd.f32 %v244, %v534
        %v536 = vpop.f32.mrb[0].mxu0
        %v537 = vpop.f32.mrb[0].mxu0
        %v538 = vadd.f32 %v244, %v537
        %v539 = vpop.f32.mrb[0].mxu0
        %540 = vmatprep.mubr.bf16.mxu0 0
        %541 = vmatmul.mubr.bf16.gmra.mrb[0].mxu0 %v354
        %v542 = vpop.f32.mrb[0].mxu0
        %v543 = vadd.f32 %v244, %v542
        %v544 = vpop.f32.mrb[0].mxu0
        %v545 = vpop.f32.mrb[0].mxu0
        %v546 = vadd.f32 %v244, %v545
        %v547 = vpop.f32.mrb[0].mxu0
        %548 = vmatprep.mubr.bf16.mxu0 0
        %549 = vmatmul.mubr.bf16.gmra.mrb[0].mxu0 %v355
        %v550 = vpop.f32.mrb[0].mxu0
        %v551 = vadd.f32 %v244, %v550
        %v552 = vpop.f32.mrb[0].mxu0
        %v553 = vpop.f32.mrb[0].mxu0
        %v554 = vadd.f32 %v244, %v553
        %v555 = vpop.f32.mrb[0].mxu0
        %556 = vmatprep.mubr.bf16.mxu0 0
        %557 = vmatmul.mubr.bf16.gmra.mrb[0].mxu0 %v356
        %v558 = vpop.f32.mrb[0].mxu0
        %v559 = vadd.f32 %v244, %v558
        %v560 = vpop.f32.mrb[0].mxu0
        %v561 = vpop.f32.mrb[0].mxu0
        %v562 = vadd.f32 %v244, %v561
        %v563 = vpop.f32.mrb[0].mxu0
        %564 = vmatprep.mubr.bf16.mxu0 0
        %565 = vmatmul.mubr.bf16.gmra.mrb[0].mxu0 %v357
        %v566 = vpop.f32.mrb[0].mxu0
        %v567 = vadd.f32 %v244, %v566
        %v568 = vpop.f32.mrb[0].mxu0
        %v569 = vpop.f32.mrb[0].mxu0
        %v570 = vadd.f32 %v244, %v569
        %v571 = vpop.f32.mrb[0].mxu0
        %572 = vmatprep.mubr.bf16.mxu0 0
        %573 = vmatmul.mubr.bf16.gmra.mrb[0].mxu0 %v358
        %v574 = vpop.f32.mrb[0].mxu0
        %v575 = vadd.f32 %v244, %v574
        %v576 = vpop.f32.mrb[0].mxu0
        %v577 = vpop.f32.mrb[0].mxu0
        %v578 = vadd.f32 %v244, %v577
        %v579 = vpop.f32.mrb[0].mxu0
        %580 = vmatprep.mubr.bf16.mxu0 0
        %581 = vmatmul.mubr.bf16.gmra.mrb[0].mxu0 %v359
        %v582 = vpop.f32.mrb[0].mxu0
        %v583 = vadd.f32 %v244, %v582
        %v584 = vpop.f32.mrb[0].mxu0
        %v585 = vpop.f32.mrb[0].mxu0
        %v586 = vadd.f32 %v244, %v585
        %v587 = vpop.f32.mrb[0].mxu0
        %588 = vmatprep.mubr.bf16.mxu0 0
        %589 = vmatmul.mubr.bf16.gmra.mrb[0].mxu0 %v360
        %v590 = vpop.f32.mrb[0].mxu0
        %v591 = vadd.f32 %v244, %v590
        %v592 = vpop.f32.mrb[0].mxu0
        %v593 = vpop.f32.mrb[0].mxu0
        %v594 = vadd.f32 %v244, %v593
        %v595 = vpop.f32.mrb[0].mxu0
        %596 = vmatprep.mubr.bf16.mxu0 0
        %597 = vmatmul.mubr.bf16.gmra.mrb[0].mxu0 %v361
        %v598 = vpop.f32.mrb[0].mxu0
        %v599 = vadd.f32 %v244, %v598
        %v600 = vpop.f32.mrb[0].mxu0
        %v601 = vpop.f32.mrb[0].mxu0
        %v602 = vadd.f32 %v244, %v601
        %v603 = vpop.f32.mrb[0].mxu0
        %604 = vmatprep.mubr.bf16.mxu0 0
        %605 = vmatmul.mubr.bf16.gmra.mrb[0].mxu0 %v362
        %v606 = vpop.f32.mrb[0].mxu0
        %v607 = vadd.f32 %v244, %v606
        %v608 = vpop.f32.mrb[0].mxu0
        %v609 = vpop.f32.mrb[0].mxu0
        %v610 = vadd.f32 %v244, %v609
        %v611 = vpop.f32.mrb[0].mxu0
        %612 = vmatprep.mubr.bf16.mxu0 0
        %613 = vmatmul.mubr.bf16.gmra.mrb[0].mxu0 %v363
        %v614 = vpop.f32.mrb[0].mxu0
        %v615 = vadd.f32 %v244, %v614
        %v616 = vpop.f32.mrb[0].mxu0
        %v617 = vpop.f32.mrb[0].mxu0
        %v618 = vadd.f32 %v244, %v617
        %v619 = vpop.f32.mrb[0].mxu0
        %620 = vmatprep.mubr.bf16.mxu0 0
        %621 = vmatmul.mubr.bf16.gmra.mrb[0].mxu0 %v364
        %v622 = vpop.f32.mrb[0].mxu0
        %v623 = vadd.f32 %v244, %v622
        %v624 = vpop.f32.mrb[0].mxu0
        %v625 = vpop.f32.mrb[0].mxu0
        %v626 = vadd.f32 %v244, %v625
        %v627 = vpop.f32.mrb[0].mxu0
        %628 = vmatprep.mubr.bf16.mxu0 0
        %629 = vmatmul.mubr.bf16.gmra.mrb[0].mxu0 %v365
        %v630 = vpop.f32.mrb[0].mxu0
        %v631 = vadd.f32 %v244, %v630
        %v632 = vpop.f32.mrb[0].mxu0
        %v633 = vpop.f32.mrb[0].mxu0
        %v634 = vadd.f32 %v244, %v633
        %v635 = vpop.f32.mrb[0].mxu0
        %636 = vmatprep.mubr.bf16.mxu0 0
        %637 = vmatmul.mubr.bf16.gmra.mrb[0].mxu0 %v366
        %v638 = vpop.f32.mrb[0].mxu0
        %v639 = vadd.f32 %v244, %v638
        %v640 = vpop.f32.mrb[0].mxu0
        %v641 = vpop.f32.mrb[0].mxu0
        %v642 = vadd.f32 %v244, %v641
        %v643 = vpop.f32.mrb[0].mxu0
        %644 = vmatprep.mubr.bf16.mxu0 0
        %645 = vmatmul.mubr.bf16.gmra.mrb[0].mxu0 %v367
        %v646 = vpop.f32.mrb[0].mxu0
        %v647 = vadd.f32 %v244, %v646
        %v648 = vpop.f32.mrb[0].mxu0
        %v649 = vpop.f32.mrb[0].mxu0
        %v650 = vadd.f32 %v244, %v649
        %v651 = vpop.f32.mrb[0].mxu0
        %652 = vmatprep.mubr.bf16.mxu0 0
        %653 = vmatmul.mubr.bf16.gmra.mrb[0].mxu0 %v368
        %v654 = vpop.f32.mrb[0].mxu0
        %v655 = vadd.f32 %v244, %v654
        %v656 = vpop.f32.mrb[0].mxu0
        %v657 = vpop.f32.mrb[0].mxu0
        %v658 = vadd.f32 %v244, %v657
        %v659 = vpop.f32.mrb[0].mxu0
        %660 = vmatprep.mubr.bf16.mxu0 0
        %661 = vmatmul.mubr.bf16.gmra.mrb[0].mxu0 %v369
        %v662 = vpop.f32.mrb[0].mxu0
        %v663 = vadd.f32 %v244, %v662
        %v664 = vpop.f32.mrb[0].mxu0
        %v665 = vpop.f32.mrb[0].mxu0
        %v666 = vadd.f32 %v244, %v665
        %v667 = vpop.f32.mrb[0].mxu0
        %668 = vmatprep.mubr.bf16.mxu0 0
        %669 = vmatmul.mubr.bf16.gmra.mrb[0].mxu0 %v370
        %v670 = vpop.f32.mrb[0].mxu0
        %v671 = vadd.f32 %v244, %v670
        %v672 = vpop.f32.mrb[0].mxu0
        %v673 = vpop.f32.mrb[0].mxu0
        %v674 = vadd.f32 %v244, %v673
        %v675 = vpop.f32.mrb[0].mxu0
        %676 = vdwg.mxu0
        %v677 = vpack.c.bf16 %v482, %v479
        %v678 = vpack.c.bf16 %v490, %v487
        %v679 = vpack.c.bf16 %v498, %v495
        %v680 = vpack.c.bf16 %v506, %v503
        %v681 = vpack.c.bf16 %v514, %v511
        %v682 = vpack.c.bf16 %v522, %v519
        %v683 = vpack.c.bf16 %v530, %v527
        %v684 = vpack.c.bf16 %v538, %v535
        %v685 = vpack.c.bf16 %v546, %v543
        %v686 = vpack.c.bf16 %v554, %v551
        %v687 = vpack.c.bf16 %v562, %v559
        %v688 = vpack.c.bf16 %v570, %v567
        %v689 = vpack.c.bf16 %v578, %v575
        %v690 = vpack.c.bf16 %v586, %v583
        %v691 = vpack.c.bf16 %v594, %v591
        %v692 = vpack.c.bf16 %v602, %v599
        %v693 = vpack.c.bf16 %v610, %v607
        %v694 = vpack.c.bf16 %v618, %v615
        %v695 = vpack.c.bf16 %v626, %v623
        %v696 = vpack.c.bf16 %v634, %v631
        %v697 = vpack.c.bf16 %v642, %v639
        %v698 = vpack.c.bf16 %v650, %v647
        %v699 = vpack.c.bf16 %v658, %v655
        %v700 = vpack.c.bf16 %v666, %v663
        %v701 = vpack.c.bf16 %v674, %v671
        %v727 = vunpack.c.l.b16 %v677
        %v728 = vunpack.c.h.b16 %v677
        %v729 = vunpack.c.l.b16 %v678
        %v730 = vunpack.c.h.b16 %v678
        %v731 = vunpack.c.l.b16 %v679
        %v732 = vunpack.c.h.b16 %v679
        %v733 = vunpack.c.l.b16 %v680
        %v734 = vunpack.c.h.b16 %v680
        %v735 = vunpack.c.l.b16 %v681
        %v736 = vunpack.c.h.b16 %v681
        %v737 = vunpack.c.l.b16 %v682
        %v738 = vunpack.c.h.b16 %v682
        %v739 = vunpack.c.l.b16 %v683
        %v740 = vunpack.c.h.b16 %v683
        %v741 = vunpack.c.l.b16 %v684
        %v742 = vunpack.c.h.b16 %v684
        %v743 = vunpack.c.l.b16 %v685
        %v744 = vunpack.c.h.b16 %v685
        %v745 = vunpack.c.l.b16 %v686
        %v746 = vunpack.c.h.b16 %v686
        %v747 = vunpack.c.l.b16 %v687
        %v748 = vunpack.c.h.b16 %v687
        %v749 = vunpack.c.l.b16 %v688
        %v750 = vunpack.c.h.b16 %v688
        %v751 = vunpack.c.l.b16 %v689
        %v752 = vunpack.c.h.b16 %v689
        %v753 = vunpack.c.l.b16 %v690
        %v754 = vunpack.c.h.b16 %v690
        %v755 = vunpack.c.l.b16 %v691
        %v756 = vunpack.c.h.b16 %v691
        %v757 = vunpack.c.l.b16 %v692
        %v758 = vunpack.c.h.b16 %v692
        %v759 = vunpack.c.l.b16 %v693
        %v760 = vunpack.c.h.b16 %v693
        %v761 = vunpack.c.l.b16 %v694
        %v762 = vunpack.c.h.b16 %v694
        %v763 = vunpack.c.l.b16 %v695
        %v764 = vunpack.c.h.b16 %v695
        %v765 = vunpack.c.l.b16 %v696
        %v766 = vunpack.c.h.b16 %v696
        %v767 = vunpack.c.l.b16 %v697
        %v768 = vunpack.c.h.b16 %v697
        %v769 = vunpack.c.l.b16 %v698
        %v770 = vunpack.c.h.b16 %v698
        %v771 = vunpack.c.l.b16 %v699
        %v772 = vunpack.c.h.b16 %v699
        %v773 = vunpack.c.l.b16 %v700
        %v774 = vunpack.c.h.b16 %v700
        %v775 = vunpack.c.l.b16 %v701
        %v776 = vunpack.c.h.b16 %v701
        %v777 = vpack.c.b16 %v727, %v727
        %v778 = vpack.c.b16 %v728, %v728
        %v779 = vpack.c.b16 %v729, %v729
        %v780 = vpack.c.b16 %v730, %v730
        %v781 = vpack.c.b16 %v731, %v731
        %v782 = vpack.c.b16 %v732, %v732
        %v783 = vpack.c.b16 %v733, %v733
        %v784 = vpack.c.b16 %v734, %v734
        %v785 = vpack.c.b16 %v735, %v735
        %v786 = vpack.c.b16 %v736, %v736
        %v787 = vpack.c.b16 %v737, %v737
        %v788 = vpack.c.b16 %v738, %v738
        %v789 = vpack.c.b16 %v739, %v739
        %v790 = vpack.c.b16 %v740, %v740
        %v791 = vpack.c.b16 %v741, %v741
        %v792 = vpack.c.b16 %v742, %v742
        %v793 = vpack.c.b16 %v743, %v743
        %v794 = vpack.c.b16 %v744, %v744
        %v795 = vpack.c.b16 %v745, %v745
        %v796 = vpack.c.b16 %v746, %v746
        %v797 = vpack.c.b16 %v747, %v747
        %v798 = vpack.c.b16 %v748, %v748
        %v799 = vpack.c.b16 %v749, %v749
        %v800 = vpack.c.b16 %v750, %v750
        %v801 = vpack.c.b16 %v751, %v751
        %v802 = vpack.c.b16 %v752, %v752
        %v803 = vpack.c.b16 %v753, %v753
        %v804 = vpack.c.b16 %v754, %v754
        %v805 = vpack.c.b16 %v755, %v755
        %v806 = vpack.c.b16 %v756, %v756
        %v807 = vpack.c.b16 %v757, %v757
        %v808 = vpack.c.b16 %v758, %v758
        %v809 = vpack.c.b16 %v759, %v759
        %v810 = vpack.c.b16 %v760, %v760
        %v811 = vpack.c.b16 %v761, %v761
        %v812 = vpack.c.b16 %v762, %v762
        %v813 = vpack.c.b16 %v763, %v763
        %v814 = vpack.c.b16 %v764, %v764
        %v815 = vpack.c.b16 %v765, %v765
        %v816 = vpack.c.b16 %v766, %v766
        %v817 = vpack.c.b16 %v767, %v767
        %v818 = vpack.c.b16 %v768, %v768
        %v819 = vpack.c.b16 %v769, %v769
        %v820 = vpack.c.b16 %v770, %v770
        %v821 = vpack.c.b16 %v771, %v771
        %v822 = vpack.c.b16 %v772, %v772
        %v823 = vpack.c.b16 %v773, %v773
        %v824 = vpack.c.b16 %v774, %v774
        %v825 = vpack.c.b16 %v775, %v775
        %v826 = vpack.c.b16 %v776, %v776
        %877 = vst [vmem:[%s164] sm:$0xf] %v777
        %878 = vst [vmem:[%s164 + $0x4] sm:$0xf] %v778
        %879 = vst [vmem:[%s164 + $0x8] sm:$0xf] %v779
        %880 = vst [vmem:[%s164 + $0xc] sm:$0xf] %v780
        %881 = vst [vmem:[%s164 + $0x10] sm:$0xf] %v781
        %882 = vst [vmem:[%s164 + $0x14] sm:$0xf] %v782
        %883 = vst [vmem:[%s164 + $0x18] sm:$0xf] %v783
        %884 = vst [vmem:[%s164 + $0x1c] sm:$0xf] %v784
        %885 = vst [vmem:[%s164 + $0x20] sm:$0xf] %v785
        %886 = vst [vmem:[%s164 + $0x24] sm:$0xf] %v786
        %887 = vst [vmem:[%s164 + $0x28] sm:$0xf] %v787
        %888 = vst [vmem:[%s164 + $0x2c] sm:$0xf] %v788
        %889 = vst [vmem:[%s164 + $0x30] sm:$0xf] %v789
        %890 = vst [vmem:[%s164 + $0x34] sm:$0xf] %v790
        %891 = vst [vmem:[%s164 + $0x38] sm:$0xf] %v791
        %892 = vst [vmem:[%s164 + $0x3c] sm:$0xf] %v792
        %893 = vst [vmem:[%s164 + $0x40] sm:$0xf] %v793
        %894 = vst [vmem:[%s164 + $0x44] sm:$0xf] %v794
        %895 = vst [vmem:[%s164 + $0x48] sm:$0xf] %v795
        %896 = vst [vmem:[%s164 + $0x4c] sm:$0xf] %v796
        %897 = vst [vmem:[%s164 + $0x50] sm:$0xf] %v797
        %898 = vst [vmem:[%s164 + $0x54] sm:$0xf] %v798
        %899 = vst [vmem:[%s164 + $0x58] sm:$0xf] %v799
        %900 = vst [vmem:[%s164 + $0x5c] sm:$0xf] %v800
        %901 = vst [vmem:[%s164 + $0x60] sm:$0xf] %v801
        %902 = vst [vmem:[%s164 + $0x64] sm:$0xf] %v802
        %903 = vst [vmem:[%s164 + $0x68] sm:$0xf] %v803
        %904 = vst [vmem:[%s164 + $0x6c] sm:$0xf] %v804
        %905 = vst [vmem:[%s164 + $0x70] sm:$0xf] %v805
        %906 = vst [vmem:[%s164 + $0x74] sm:$0xf] %v806
        %907 = vst [vmem:[%s164 + $0x78] sm:$0xf] %v807
        %908 = vst [vmem:[%s164 + $0x7c] sm:$0xf] %v808
        %909 = vst [vmem:[%s164 + $0x80] sm:$0xf] %v809
        %910 = vst [vmem:[%s164 + $0x84] sm:$0xf] %v810
        %911 = vst [vmem:[%s164 + $0x88] sm:$0xf] %v811
        %912 = vst [vmem:[%s164 + $0x8c] sm:$0xf] %v812
        %913 = vst [vmem:[%s164 + $0x90] sm:$0xf] %v813
        %914 = vst [vmem:[%s164 + $0x94] sm:$0xf] %v814
        %915 = vst [vmem:[%s164 + $0x98] sm:$0xf] %v815
        %916 = vst [vmem:[%s164 + $0x9c] sm:$0xf] %v816
        %917 = vst [vmem:[%s164 + $0xa0] sm:$0xf] %v817
        %918 = vst [vmem:[%s164 + $0xa4] sm:$0xf] %v818
        %919 = vst [vmem:[%s164 + $0xa8] sm:$0xf] %v819
        %920 = vst [vmem:[%s164 + $0xac] sm:$0xf] %v820
        %921 = vst [vmem:[%s164 + $0xb0] sm:$0xf] %v821
        %922 = vst [vmem:[%s164 + $0xb4] sm:$0xf] %v822
        %923 = vst [vmem:[%s164 + $0xb8] sm:$0xf] %v823
        %924 = vst [vmem:[%s164 + $0xbc] sm:$0xf] %v824
        %925 = vst [vmem:[%s164 + $0xc0] sm:$0xf] %v825
        %926 = vst [vmem:[%s164 + $0xc4] sm:$0xf] %v826
        %s927 = sand.u32 %s93, 1
        %s928 = scalar_lea.sflag [#allocation3], %s927
        %s929 = sand.u32 %s93, 1
        %s930 = smul.addr %s929, 200
        %s931 = scalar_lea.vmem [#allocation2], %s930
        // Predicated region
        $region33: #{cuboids_forward.1} parent=31 // pred_check
          %p932 = pneg %p103
        $region34: #{cuboids_forward.1} parent=31 // pred_check_branch
          %934 = sbr.rel (%p932) target = $region36
        $region35: #{cuboids_forward.1} parent=31 // pred_region
          %s935 = smul.u32 50, %s17
          %s937 = ssub.s32 3200, 3200
          %938 = vsyncadd %s928, %s937
          %s939 = smul.addr %s935, 64
          %s940 = scalar_lea.hbm %s3, %s939
          %s941 = sshll.u32 %s931, 4
          %s942 = int_to_ptr.vmem [resolvable:$true] %s941
          %947 = dma.vmem_to_hbm [thread:$0]  %s942, 3200, %s940, %s928, 64, 64, 4
        $region36: #{cuboids_forward.1} parent=31 // pred_fallthru
          _
      $region32: #{cuboids_forward.1} parent=5 // pred_fallthru
        _
      %p948 = scmp.le.s32.totalorder 2, %s12
      // Predicated region
      $region37: #{cuboids_forward.1} parent=5 // pred_check
        %p949 = pneg %p948
      $region38: #{cuboids_forward.1} parent=5 // pred_check_branch
        %951 = sbr.rel (%p949) target = $region40
      $region39: #{cuboids_forward.1} parent=5 // pred_region
        %s952 = ssub.s32 %s12, 2
        // Predicated region
        $region41: #{cuboids_forward.1} parent=39 // pred_check
          %p953 = pneg %p109
        $region42: #{cuboids_forward.1} parent=39 // pred_check_branch
          %955 = sbr.rel (%p953) target = $region44
        $region43: #{cuboids_forward.1} parent=39 // pred_region
          %s956 = sand.u32 %s94, 1
          %s957 = scalar_lea.sflag [#allocation3], %s956
          %s958 = sand.u32 %s94, 1
          %s959 = smul.addr %s958, 200
          %s960 = scalar_lea.vmem [#allocation2], %s959
          %961 = dma.done %s957, 3200
        $region44: #{cuboids_forward.1} parent=39 // pred_fallthru
          _
      $region40: #{cuboids_forward.1} parent=5 // pred_fallthru
        _
    $region6: #{cuboids_forward.1} parent=1 // loop_footer
      %s16 = sadd.s32 1, %s12
    $region7: #{cuboids_forward.1} parent=1 // loop_footer_branch
      %11 = sbr.rel target = $region3
    $region8: #{cuboids_forward.1} parent=1 // loop_exit
      _
    %962 = vsyncpa [#allocation3], 1
    %s963 = scalar_lea.sflag [#allocation3], 1
    %964 = vsyncpa %s963, 1

</llo_original>
